<compile_context>
chip_gen: v7x
topology: tpu7x:2x2x1
jax: 0.10.0
libtpu: 0.0.40
codegen_flags: <defaults>
</compile_context>

<pallas_src>
import functools

import jax
import jax.numpy as jnp
from jax.experimental import pallas as pl
from jax.experimental.pallas import tpu as pltpu


# Budget for 2 x double-buffered (input + output) blocks; conservative enough
# for v7x's 64 MiB physical / 32 MiB default-scoped VMEM.
_MAX_RESIDENT_BYTES = 24 * 1024 * 1024


# -----------------------------------------------------------------------------
# Fused single-pass kernel: whole (Bt, C, S) slab resident in VMEM.
# -----------------------------------------------------------------------------
def _fused_kernel(x_ref, w1t_ref, b1_ref, w2t_ref, b2_ref, o_ref):
    # x_ref : (Bt, C, S)  lane-dense activation block (S = D*H*W on lanes)
    # w1t   : (C, Ch)     first Linear weight, transposed  (h = p @ w1t + b1)
    # b1    : (1, Ch)
    # w2t   : (Ch, C)     second Linear weight, transposed (a = h @ w2t + b2)
    # b2    : (1, C)
    x = x_ref[...]

    # Global spatial pooling: lane-axis reduce -> (Bt, C), stats kept in f32.
    p_avg = jnp.mean(x, axis=-1, dtype=jnp.float32)        # (Bt, C)
    p_max = jnp.max(x, axis=-1).astype(jnp.float32)        # (Bt, C)

    # Fused shared MLP over both pooled statistics: ONE matmul pair.
    bt = x.shape[0]
    p = jnp.concatenate([p_avg, p_max], axis=0)            # (2*Bt, C)
    h = jnp.dot(p, w1t_ref[...], preferred_element_type=jnp.float32) + b1_ref[...]
    h = jnp.maximum(h, 0.0)                                 # (2*Bt, Ch)
    a = jnp.dot(h, w2t_ref[...], preferred_element_type=jnp.float32) + b2_ref[...]
    att = a[:bt] + a[bt:]                                   # (Bt, C)

    scale = jax.nn.sigmoid(att)                             # (Bt, C)
    o_ref[...] = (x * scale[:, :, None]).astype(o_ref.dtype)


# -----------------------------------------------------------------------------
# Two-pass path for large C*S (decouples VMEM from S).
# Pass 1: running sum/max over S tiles, MLP + sigmoid on the last tile.
# -----------------------------------------------------------------------------
def _pool_mlp_kernel(x_ref, w1t_ref, b1_ref, w2t_ref, b2_ref, scale_ref,
                     sum_scr, max_scr, *, inv_s):
    s = pl.program_id(1)

    @pl.when(s == 0)
    def _():
        sum_scr[...] = jnp.zeros_like(sum_scr)
        max_scr[...] = jnp.full_like(max_scr, -jnp.inf)

    x = x_ref[...]                                          # (Bt, C, St)
    sum_scr[...] += jnp.sum(x, axis=-1, dtype=jnp.float32)
    max_scr[...] = jnp.maximum(max_scr[...],
                               jnp.max(x, axis=-1).astype(jnp.float32))

    @pl.when(s == pl.num_programs(1) - 1)
    def _():
        bt = sum_scr.shape[0]
        p = jnp.concatenate([sum_scr[...] * inv_s, max_scr[...]], axis=0)
        h = jnp.dot(p, w1t_ref[...], preferred_element_type=jnp.float32) + b1_ref[...]
        h = jnp.maximum(h, 0.0)
        a = jnp.dot(h, w2t_ref[...], preferred_element_type=jnp.float32) + b2_ref[...]
        att = a[:bt] + a[bt:]                               # (Bt, C)
        scale_ref[...] = jax.nn.sigmoid(att)[:, :, None]    # (Bt, C, 1)


# Pass 2: pure elementwise gating, fully parallel lane-dense blocks.
def _gate_kernel(x_ref, scale_ref, o_ref):
    o_ref[...] = (x_ref[...] * scale_ref[...]).astype(o_ref.dtype)


# -----------------------------------------------------------------------------
# Wrapper
# -----------------------------------------------------------------------------
def _largest_divisor_leq(n, cap):
    cap = max(1, min(n, cap))
    for d in range(cap, 0, -1):
        if n % d == 0:
            return d
    return 1


def _compiler_params(in_block_bytes, out_block_bytes, extra_bytes, sem):
    # Double-buffered in + out blocks + weights + slack; keep <= 48 MiB so the
    # same request is valid on v7x (64 MiB physical per TC).
    need = 2 * (in_block_bytes + out_block_bytes) + extra_bytes + (1 << 20)
    limit = int(min(max(need, 32 * 1024 * 1024), 48 * 1024 * 1024))
    return pltpu.CompilerParams(dimension_semantics=sem, vmem_limit_bytes=limit)


def channel_gate_3d(x, w1, b1, w2, b2, *, two_pass=None, s_tile=None):
    """ChannelGate3D forward (pool_types=['avg', 'max']).

    x: (N, C, D, H, W); w1: (C//r, C); b1: (C//r,); w2: (C, C//r); b2: (C,).
    """
    N, C, D, H, W = x.shape
    S = D * H * W
    Ch = w1.shape[0]
    item = jnp.dtype(x.dtype).itemsize

    w1t = jnp.asarray(w1, jnp.float32).T                    # (C, Ch)
    w2t = jnp.asarray(w2, jnp.float32).T                    # (Ch, C)
    b1r = jnp.asarray(b1, jnp.float32).reshape(1, Ch)
    b2r = jnp.asarray(b2, jnp.float32).reshape(1, C)
    weight_bytes = 4 * (2 * C * Ch + Ch + C)

    # TODO(synk): in a real model, keep the activation in (N, C, S) (128-multiple
    # trailing dim) across adjacent ops so these reshapes never materialize a
    # relayout copy in HBM; this op is bandwidth-bound on every generation.
    x_flat = x.reshape(N, C, S)

    per_elem = C * S * item
    if two_pass is None:
        two_pass = 4 * per_elem > _MAX_RESIDENT_BYTES

    if not two_pass:
        # ---------------- fused single-pass path -----------------------------
        bt = _largest_divisor_leq(N, max(1, _MAX_RESIDENT_BYTES // (4 * per_elem)))
        out_flat = pl.pallas_call(
            _fused_kernel,
            out_shape=jax.ShapeDtypeStruct((N, C, S), x.dtype),
            grid_spec=pltpu.PrefetchScalarGridSpec(
                num_scalar_prefetch=0,
                grid=(N // bt,),
                in_specs=[
                    pl.BlockSpec((bt, C, S), lambda n: (n, 0, 0)),
                    pl.BlockSpec((C, Ch), lambda n: (0, 0)),
                    pl.BlockSpec((1, Ch), lambda n: (0, 0)),
                    pl.BlockSpec((Ch, C), lambda n: (0, 0)),
                    pl.BlockSpec((1, C), lambda n: (0, 0)),
                ],
                out_specs=pl.BlockSpec((bt, C, S), lambda n: (n, 0, 0)),
            ),
            compiler_params=_compiler_params(bt * per_elem, bt * per_elem,
                                             weight_bytes, ("parallel",)),
        )(x_flat, w1t, b1r, w2t, b2r)
        return out_flat.reshape(N, C, D, H, W)

    # -------------------- two-pass (S-tiled) path ----------------------------
    if s_tile is None:
        bt = _largest_divisor_leq(
            N, max(1, _MAX_RESIDENT_BYTES // (4 * C * 128 * item)))
        if S % 128 == 0:
            st_cap = max(128, (_MAX_RESIDENT_BYTES // (4 * bt * C * item)) // 128 * 128)
            st = 128 * _largest_divisor_leq(S // 128, st_cap // 128)
        else:
            # Ragged spatial extent: S tiling would need explicit tail masking,
            # so keep a single full-S block.
            st = S
    else:
        st = s_tile
        assert S % st == 0 and (st % 128 == 0 or st == S)
        bt = _largest_divisor_leq(
            N, max(1, _MAX_RESIDENT_BYTES // (4 * C * st * item)))

    block_bytes = bt * C * st * item

    # Pass 1: pooled statistics + MLP + sigmoid -> scale (N, C, 1) f32.
    scale = pl.pallas_call(
        functools.partial(_pool_mlp_kernel, inv_s=1.0 / S),
        out_shape=jax.ShapeDtypeStruct((N, C, 1), jnp.float32),
        grid_spec=pltpu.PrefetchScalarGridSpec(
            num_scalar_prefetch=0,
            grid=(N // bt, S // st),
            in_specs=[
                pl.BlockSpec((bt, C, st), lambda n, s: (n, 0, s)),
                pl.BlockSpec((C, Ch), lambda n, s: (0, 0)),
                pl.BlockSpec((1, Ch), lambda n, s: (0, 0)),
                pl.BlockSpec((Ch, C), lambda n, s: (0, 0)),
                pl.BlockSpec((1, C), lambda n, s: (0, 0)),
            ],
            out_specs=pl.BlockSpec((bt, C, 1), lambda n, s: (n, 0, 0)),
            scratch_shapes=[pltpu.VMEM((bt, C), jnp.float32),
                            pltpu.VMEM((bt, C), jnp.float32)],
        ),
        compiler_params=_compiler_params(block_bytes, bt * C * 4, weight_bytes,
                                         ("parallel", "arbitrary")),
    )(x_flat, w1t, b1r, w2t, b2r)

    # Pass 2: elementwise gating over fully parallel, lane-dense blocks.
    out_flat = pl.pallas_call(
        _gate_kernel,
        out_shape=jax.ShapeDtypeStruct((N, C, S), x.dtype),
        grid_spec=pltpu.PrefetchScalarGridSpec(
            num_scalar_prefetch=0,
            grid=(N // bt, S // st),
            in_specs=[
                pl.BlockSpec((bt, C, st), lambda n, s: (n, 0, s)),
                pl.BlockSpec((bt, C, 1), lambda n, s: (n, 0, 0)),
            ],
            out_specs=pl.BlockSpec((bt, C, st), lambda n, s: (n, 0, s)),
        ),
        compiler_params=_compiler_params(block_bytes + bt * C * 4, block_bytes,
                                         0, ("parallel", "parallel")),
    )(x_flat, scale)
    return out_flat.reshape(N, C, D, H, W)


# -----------------------------------------------------------------------------
# Pure-JAX reference matching the PyTorch ChannelGate3D forward.
# -----------------------------------------------------------------------------
def reference(x, w1, b1, w2, b2):
    N, C = x.shape[0], x.shape[1]
    flat = x.reshape(N, C, -1)
    avg = jnp.mean(flat, axis=-1)                           # (N, C)
    mx = jnp.max(flat, axis=-1)                             # (N, C)

    def mlp(p):
        h = jnp.maximum(p @ w1.T + b1, 0.0)
        return h @ w2.T + b2

    att = mlp(avg) + mlp(mx)                                # (N, C)
    scale = jax.nn.sigmoid(att)
    return x * scale[:, :, None, None, None]


if __name__ == "__main__":
    key = jax.random.PRNGKey(0)

    def make_params(k, C, r):
        Ch = max(1, C // r)
        k1, k2, k3, k4 = jax.random.split(k, 4)
        bound1 = 1.0 / (C ** 0.5)
        w1 = jax.random.uniform(k1, (Ch, C), jnp.float32, -bound1, bound1)
        b1 = jax.random.uniform(k2, (Ch,), jnp.float32, -bound1, bound1)
        bound2 = 1.0 / (Ch ** 0.5)
        w2 = jax.random.uniform(k3, (C, Ch), jnp.float32, -bound2, bound2)
        b2 = jax.random.uniform(k4, (C,), jnp.float32, -bound2, bound2)
        return w1, b1, w2, b2

    def check(out, ref, tol=1e-4):
        out = jax.block_until_ready(out)
        assert out.shape == ref.shape and out.dtype == ref.dtype
        err = float(jnp.max(jnp.abs(out - ref)))
        assert err < tol, f"mismatch vs reference: max abs err = {err}"

    # gate_channels=32, reduction_ratio=16 -> hidden=2
    k0, kx = jax.random.split(key)
    w1, b1, w2, b2 = make_params(k0, 32, 16)

    # 1) Main shape: batch-blocked fused path (Bt=2, S=2048 lane-dense).
    x = jax.random.normal(kx, (2, 32, 8, 16, 16), jnp.float32)
    check(channel_gate_3d(x, w1, b1, w2, b2), reference(x, w1, b1, w2, b2))

    # 2) Non-128-multiple spatial extent (S = 7*7*7 = 343): lane padding must
    #    not leak into the max / mean.
    x2 = jax.random.normal(jax.random.fold_in(key, 1), (3, 32, 7, 7, 7),
                           jnp.float32)
    check(channel_gate_3d(x2, w1, b1, w2, b2), reference(x2, w1, b1, w2, b2))

    # 3) Forced two-pass S-tiled path (4 S-tiles of 128 lanes).
    x3 = jax.random.normal(jax.random.fold_in(key, 2), (2, 32, 4, 8, 16),
                           jnp.float32)
    check(channel_gate_3d(x3, w1, b1, w2, b2, two_pass=True, s_tile=128),
          reference(x3, w1, b1, w2, b2))

    print("KERNEL_OK")
</pallas_src>

<mosaic_0001>
module attributes {stable_mosaic.version = 11 : i64} {
  func.func @_fused_kernel(%arg0: i32, %arg1: memref<2x32x2048xf32, #tpu.memory_space<vmem>>, %arg2: memref<32x2xf32, #tpu.memory_space<vmem>>, %arg3: memref<1x2xf32, #tpu.memory_space<vmem>>, %arg4: memref<2x32xf32, #tpu.memory_space<vmem>>, %arg5: memref<1x32xf32, #tpu.memory_space<vmem>>, %arg6: memref<2x32x2048xf32, #tpu.memory_space<vmem>>) attributes {dimension_semantics = [#tpu.dimension_semantics<parallel>], iteration_bounds = array<i64: 1>, scalar_prefetch = 0 : i64, scratch_operands = 0 : i64, tpu.core_type = #tpu.core_type<tc>, window_params = [{transform_indices = @transform_0, window_bounds = array<i64: 2, 32, 2048>}, {pipeline_mode = #tpu.pipeline_mode<synchronous>, transform_indices = @transform_1, window_bounds = array<i64: 32, 2>}, {pipeline_mode = #tpu.pipeline_mode<synchronous>, transform_indices = @transform_2, window_bounds = array<i64: 1, 2>}, {pipeline_mode = #tpu.pipeline_mode<synchronous>, transform_indices = @transform_3, window_bounds = array<i64: 2, 32>}, {pipeline_mode = #tpu.pipeline_mode<synchronous>, transform_indices = @transform_4, window_bounds = array<i64: 1, 32>}, {transform_indices = @transform_5, window_bounds = array<i64: 2, 32, 2048>}]} {
    %c0 = arith.constant 0 : index
    %c0_0 = arith.constant 0 : index
    %c0_1 = arith.constant 0 : index
    %0 = vector.load %arg1[%c0, %c0_0, %c0_1] : memref<2x32x2048xf32, #tpu.memory_space<vmem>>, vector<2x32x2048xf32>
    %cst = arith.constant dense<0.000000e+00> : vector<2x32xf32>
    %1 = vector.multi_reduction <add>, %0, %cst [2] : vector<2x32x2048xf32> to vector<2x32xf32>
    %cst_2 = arith.constant 2.048000e+03 : f32
    %2 = vector.broadcast %cst_2 : f32 to vector<2x32xf32>
    %3 = arith.divf %1, %2 : vector<2x32xf32>
    %cst_3 = arith.constant dense<0xFF800000> : vector<2x32xf32>
    %4 = vector.multi_reduction <maximumf>, %0, %cst_3 [2] : vector<2x32x2048xf32> to vector<2x32xf32>
    %5 = tpu.concatenate %3, %4 in 0 : vector<2x32xf32>, vector<2x32xf32> -> vector<4x32xf32>
    %c0_4 = arith.constant 0 : index
    %c0_5 = arith.constant 0 : index
    %6 = vector.load %arg2[%c0_4, %c0_5] : memref<32x2xf32, #tpu.memory_space<vmem>>, vector<32x2xf32>
    %cst_6 = arith.constant dense<0.000000e+00> : vector<4x2xf32>
    %7 = tpu.matmul %5, %6, %cst_6 {dimension_numbers = #tpu.dot_dimension_numbers<[1], [0], [0], [1], [0, 0, 1, 1], [], []>} : vector<4x32xf32>, vector<32x2xf32>, vector<4x2xf32> -> vector<4x2xf32>
    %c0_7 = arith.constant 0 : index
    %c0_8 = arith.constant 0 : index
    %8 = vector.load %arg3[%c0_7, %c0_8] : memref<1x2xf32, #tpu.memory_space<vmem>>, vector<1x2xf32>
    %9 = vector.broadcast %8 : vector<1x2xf32> to vector<4x2xf32>
    %10 = arith.addf %7, %9 : vector<4x2xf32>
    %cst_9 = arith.constant 0.000000e+00 : f32
    %11 = vector.broadcast %cst_9 : f32 to vector<4x2xf32>
    %12 = arith.maximumf %10, %11 : vector<4x2xf32>
    %c0_10 = arith.constant 0 : index
    %c0_11 = arith.constant 0 : index
    %13 = vector.load %arg4[%c0_10, %c0_11] : memref<2x32xf32, #tpu.memory_space<vmem>>, vector<2x32xf32>
    %cst_12 = arith.constant dense<0.000000e+00> : vector<4x32xf32>
    %14 = tpu.matmul %12, %13, %cst_12 {dimension_numbers = #tpu.dot_dimension_numbers<[1], [0], [0], [1], [0, 0, 1, 1], [], []>} : vector<4x2xf32>, vector<2x32xf32>, vector<4x32xf32> -> vector<4x32xf32>
    %c0_13 = arith.constant 0 : index
    %c0_14 = arith.constant 0 : index
    %15 = vector.load %arg5[%c0_13, %c0_14] : memref<1x32xf32, #tpu.memory_space<vmem>>, vector<1x32xf32>
    %16 = vector.broadcast %15 : vector<1x32xf32> to vector<4x32xf32>
    %17 = arith.addf %14, %16 : vector<4x32xf32>
    %18 = vector.extract_strided_slice %17 {offsets = [0, 0], sizes = [2, 32], strides = [1, 1]} : vector<4x32xf32> to vector<2x32xf32>
    %19 = vector.extract_strided_slice %17 {offsets = [2, 0], sizes = [2, 32], strides = [1, 1]} : vector<4x32xf32> to vector<2x32xf32>
    %20 = arith.addf %18, %19 : vector<2x32xf32>
    %21 = arith.negf %20 : vector<2x32xf32>
    %22 = math.exp %21 : vector<2x32xf32>
    %cst_15 = arith.constant 1.000000e+00 : f32
    %23 = vector.broadcast %cst_15 : f32 to vector<2x32xf32>
    %24 = arith.addf %23, %22 : vector<2x32xf32>
    %25 = arith.divf %23, %24 : vector<2x32xf32>
    %26 = vector.shape_cast %25 : vector<2x32xf32> to vector<2x32x1xf32>
    %27 = vector.broadcast %26 : vector<2x32x1xf32> to vector<2x32x2048xf32>
    %28 = arith.mulf %0, %27 : vector<2x32x2048xf32>
    %c0_16 = arith.constant 0 : index
    %c0_17 = arith.constant 0 : index
    %c0_18 = arith.constant 0 : index
    %29 = vector.load %arg6[%c0_16, %c0_17, %c0_18] : memref<2x32x2048xf32, #tpu.memory_space<vmem>>, vector<2x32x2048xf32>
    tpu.vector_store %arg6[%c0_16, %c0_17, %c0_18], %28 {strides = array<i32>} : memref<2x32x2048xf32, #tpu.memory_space<vmem>>, vector<2x32x2048xf32>,
    return
  }
  func.func @transform_0(%arg0: i32) -> (i32, i32, i32) {
    %c0_i32 = arith.constant 0 : i32
    %c0_i32_0 = arith.constant 0 : i32
    %c0_i32_1 = arith.constant 0 : i32
    return %arg0, %c0_i32, %c0_i32_0 : i32, i32, i32
  }
  func.func @transform_1(%arg0: i32) -> (i32, i32) {
    %c0_i32 = arith.constant 0 : i32
    %c0_i32_0 = arith.constant 0 : i32
    %c0_i32_1 = arith.constant 0 : i32
    return %c0_i32, %c0_i32_0 : i32, i32
  }
  func.func @transform_2(%arg0: i32) -> (i32, i32) {
    %c0_i32 = arith.constant 0 : i32
    %c0_i32_0 = arith.constant 0 : i32
    %c0_i32_1 = arith.constant 0 : i32
    return %c0_i32, %c0_i32_0 : i32, i32
  }
  func.func @transform_3(%arg0: i32) -> (i32, i32) {
    %c0_i32 = arith.constant 0 : i32
    %c0_i32_0 = arith.constant 0 : i32
    %c0_i32_1 = arith.constant 0 : i32
    return %c0_i32, %c0_i32_0 : i32, i32
  }
  func.func @transform_4(%arg0: i32) -> (i32, i32) {
    %c0_i32 = arith.constant 0 : i32
    %c0_i32_0 = arith.constant 0 : i32
    %c0_i32_1 = arith.constant 0 : i32
    return %c0_i32, %c0_i32_0 : i32, i32
  }
  func.func @transform_5(%arg0: i32) -> (i32, i32, i32) {
    %c0_i32 = arith.constant 0 : i32
    %c0_i32_0 = arith.constant 0 : i32
    %c0_i32_1 = arith.constant 0 : i32
    return %arg0, %c0_i32, %c0_i32_0 : i32, i32, i32
  }
}

</mosaic_0001>

<llo_original>
// kernel: tpu_custom_call.1
$region0: #{tpu_custom_call.1}
  #allocation0 [shape = 'u32[]', space=smem, size = 0x4, offset = 0x4, fixed_abs, tag = 'smem constant byte address 0x4 - core index']
  #allocation1 [shape = 'u32[144,128]{1,0:T(1,128)}', space=vmem, size = 0x12000, scoped, tag = 'internal scratch']
  %s0 = inlined_call_operand.hbm [shape: f32[2,32,2048], index: 0, kind: input, shape index: {}]
  %s1 = inlined_call_operand.vmem [shape: f32[32,2], index: 1, kind: input, shape index: {}]
  %s2 = inlined_call_operand.vmem [shape: f32[1,2], index: 2, kind: input, shape index: {}]
  %s3 = inlined_call_operand.vmem [shape: f32[2,32], index: 3, kind: input, shape index: {}]
  %s4 = inlined_call_operand.vmem [shape: f32[1,32], index: 4, kind: input, shape index: {}]
  %s5 = inlined_call_operand.hbm [shape: f32[2,32,2048], index: 5, kind: output, shape index: {}]
  %s6 = sld [smem:[#allocation0]]
  $region34: #{tpu_custom_call.1} parent=0
    _
  %s8 = ssub.s32 1, %s6
  %s9 = scalar_select 0, %s8, %s6
  $region1: #{tpu_custom_call.1} parent=0
    #allocation2 [shape = 'u8[524288]{0}', space=vmem, size = 0x80000, scoped, tag = 'input window, operand 0, single buffered']
    #allocation3 [shape = 's32[1]{0}', space=sflag, size = 0x4, scoped, tag = 'scoped memory for tpu_custom_call.1']
    #allocation4 [shape = 's32[1]{0}', space=sflag, size = 0x4, scoped, tag = 'scoped memory for tpu_custom_call.1']
    #allocation5 [shape = 'u8[524288]{0}', space=vmem, size = 0x80000, scoped, tag = 'output window, operand 0, single buffered']
    %10 = vsyncpa [#allocation3], 0
    %11 = vsyncpa [#allocation4], 0
    // Predicated region
    $region2: #{tpu_custom_call.1} parent=1 // pred_check
      _
    $region3: #{tpu_custom_call.1} parent=1 // pred_check_branch
      %13 = sbr.rel (0) target = $region5
    $region4: #{tpu_custom_call.1} parent=1 // pred_region
      %s15 = ssub.s32 16384, 16384
      %16 = vsyncadd [#allocation3], %s15
      %s17 = sshll.u32 [#allocation2], 4
      %s18 = int_to_ptr.vmem [resolvable:$true] %s17
      %23 = dma.hbm_to_vmem [thread:$0]  %s0, 16384, %s18, [#allocation3], 2048, 2048, 128
    $region5: #{tpu_custom_call.1} parent=1 // pred_fallthru
      _
    // Predicated region
    $region6: #{tpu_custom_call.1} parent=1 // pred_check
      _
    $region7: #{tpu_custom_call.1} parent=1 // pred_check_branch
      %25 = sbr.rel (0) target = $region9
    $region8: #{tpu_custom_call.1} parent=1 // pred_region
      _
    $region9: #{tpu_custom_call.1} parent=1 // pred_fallthru
      _
    // Predicated region
    $region10: #{tpu_custom_call.1} parent=1 // pred_check
      _
    $region11: #{tpu_custom_call.1} parent=1 // pred_check_branch
      %27 = sbr.rel (0) target = $region13
    $region12: #{tpu_custom_call.1} parent=1 // pred_region
      _
    $region13: #{tpu_custom_call.1} parent=1 // pred_fallthru
      _
    // Predicated region
    $region14: #{tpu_custom_call.1} parent=1 // pred_check
      _
    $region15: #{tpu_custom_call.1} parent=1 // pred_check_branch
      %29 = sbr.rel (0) target = $region17
    $region16: #{tpu_custom_call.1} parent=1 // pred_region
      _
    $region17: #{tpu_custom_call.1} parent=1 // pred_fallthru
      _
    // Predicated region
    $region18: #{tpu_custom_call.1} parent=1 // pred_check
      _
    $region19: #{tpu_custom_call.1} parent=1 // pred_check_branch
      %31 = sbr.rel (0) target = $region21
    $region20: #{tpu_custom_call.1} parent=1 // pred_region
      _
    $region21: #{tpu_custom_call.1} parent=1 // pred_fallthru
      _
    // Predicated region
    $region22: #{tpu_custom_call.1} parent=1 // pred_check
      _
    $region23: #{tpu_custom_call.1} parent=1 // pred_check_branch
      %33 = sbr.rel (0) target = $region25
    $region24: #{tpu_custom_call.1} parent=1 // pred_region
      %34 = dma.done [#allocation3], 16384
    $region25: #{tpu_custom_call.1} parent=1 // pred_fallthru
      _
    %v35 = vld [vmem:[#allocation2] sm:$0xff]
    %v36 = vld [vmem:[#allocation2 + $0x8] sm:$0xff]
    %v37 = vld [vmem:[#allocation2 + $0x10] sm:$0xff]
    %v38 = vld [vmem:[#allocation2 + $0x18] sm:$0xff]
    %v39 = vld [vmem:[#allocation2 + $0x20] sm:$0xff]
    %v40 = vld [vmem:[#allocation2 + $0x28] sm:$0xff]
    %v41 = vld [vmem:[#allocation2 + $0x30] sm:$0xff]
    %v42 = vld [vmem:[#allocation2 + $0x38] sm:$0xff]
    %v43 = vld [vmem:[#allocation2 + $0x40] sm:$0xff]
    %v44 = vld [vmem:[#allocation2 + $0x48] sm:$0xff]
    %v45 = vld [vmem:[#allocation2 + $0x50] sm:$0xff]
    %v46 = vld [vmem:[#allocation2 + $0x58] sm:$0xff]
    %v47 = vld [vmem:[#allocation2 + $0x60] sm:$0xff]
    %v48 = vld [vmem:[#allocation2 + $0x68] sm:$0xff]
    %v49 = vld [vmem:[#allocation2 + $0x70] sm:$0xff]
    %v50 = vld [vmem:[#allocation2 + $0x78] sm:$0xff]
    %v51 = vld [vmem:[#allocation2 + $0x80] sm:$0xff]
    %v52 = vld [vmem:[#allocation2 + $0x88] sm:$0xff]
    %v53 = vld [vmem:[#allocation2 + $0x90] sm:$0xff]
    %v54 = vld [vmem:[#allocation2 + $0x98] sm:$0xff]
    %v55 = vld [vmem:[#allocation2 + $0xa0] sm:$0xff]
    %v56 = vld [vmem:[#allocation2 + $0xa8] sm:$0xff]
    %v57 = vld [vmem:[#allocation2 + $0xb0] sm:$0xff]
    %v58 = vld [vmem:[#allocation2 + $0xb8] sm:$0xff]
    %v59 = vld [vmem:[#allocation2 + $0xc0] sm:$0xff]
    %v60 = vld [vmem:[#allocation2 + $0xc8] sm:$0xff]
    %v61 = vld [vmem:[#allocation2 + $0xd0] sm:$0xff]
    %v62 = vld [vmem:[#allocation2 + $0xd8] sm:$0xff]
    %v63 = vld [vmem:[#allocation2 + $0xe0] sm:$0xff]
    %v64 = vld [vmem:[#allocation2 + $0xe8] sm:$0xff]
    %v65 = vld [vmem:[#allocation2 + $0xf0] sm:$0xff]
    %v66 = vld [vmem:[#allocation2 + $0xf8] sm:$0xff]
    %v67 = vld [vmem:[#allocation2 + $0x100] sm:$0xff]
    %v68 = vld [vmem:[#allocation2 + $0x108] sm:$0xff]
    %v69 = vld [vmem:[#allocation2 + $0x110] sm:$0xff]
    %v70 = vld [vmem:[#allocation2 + $0x118] sm:$0xff]
    %v71 = vld [vmem:[#allocation2 + $0x120] sm:$0xff]
    %v72 = vld [vmem:[#allocation2 + $0x128] sm:$0xff]
    %v73 = vld [vmem:[#allocation2 + $0x130] sm:$0xff]
    %v74 = vld [vmem:[#allocation2 + $0x138] sm:$0xff]
    %v75 = vld [vmem:[#allocation2 + $0x140] sm:$0xff]
    %v76 = vld [vmem:[#allocation2 + $0x148] sm:$0xff]
    %v77 = vld [vmem:[#allocation2 + $0x150] sm:$0xff]
    %v78 = vld [vmem:[#allocation2 + $0x158] sm:$0xff]
    %v79 = vld [vmem:[#allocation2 + $0x160] sm:$0xff]
    %v80 = vld [vmem:[#allocation2 + $0x168] sm:$0xff]
    %v81 = vld [vmem:[#allocation2 + $0x170] sm:$0xff]
    %v82 = vld [vmem:[#allocation2 + $0x178] sm:$0xff]
    %v83 = vld [vmem:[#allocation2 + $0x180] sm:$0xff]
    %v84 = vld [vmem:[#allocation2 + $0x188] sm:$0xff]
    %v85 = vld [vmem:[#allocation2 + $0x190] sm:$0xff]
    %v86 = vld [vmem:[#allocation2 + $0x198] sm:$0xff]
    %v87 = vld [vmem:[#allocation2 + $0x1a0] sm:$0xff]
    %v88 = vld [vmem:[#allocation2 + $0x1a8] sm:$0xff]
    %v89 = vld [vmem:[#allocation2 + $0x1b0] sm:$0xff]
    %v90 = vld [vmem:[#allocation2 + $0x1b8] sm:$0xff]
    %v91 = vld [vmem:[#allocation2 + $0x1c0] sm:$0xff]
    %v92 = vld [vmem:[#allocation2 + $0x1c8] sm:$0xff]
    %v93 = vld [vmem:[#allocation2 + $0x1d0] sm:$0xff]
    %v94 = vld [vmem:[#allocation2 + $0x1d8] sm:$0xff]
    %v95 = vld [vmem:[#allocation2 + $0x1e0] sm:$0xff]
    %v96 = vld [vmem:[#allocation2 + $0x1e8] sm:$0xff]
    %v97 = vld [vmem:[#allocation2 + $0x1f0] sm:$0xff]
    %v98 = vld [vmem:[#allocation2 + $0x1f8] sm:$0xff]
    %v99 = vld [vmem:[#allocation2 + $0x200] sm:$0xff]
    %v100 = vld [vmem:[#allocation2 + $0x208] sm:$0xff]
    %v101 = vld [vmem:[#allocation2 + $0x210] sm:$0xff]
    %v102 = vld [vmem:[#allocation2 + $0x218] sm:$0xff]
    %v103 = vld [vmem:[#allocation2 + $0x220] sm:$0xff]
    %v104 = vld [vmem:[#allocation2 + $0x228] sm:$0xff]
    %v105 = vld [vmem:[#allocation2 + $0x230] sm:$0xff]
    %v106 = vld [vmem:[#allocation2 + $0x238] sm:$0xff]
    %v107 = vld [vmem:[#allocation2 + $0x240] sm:$0xff]
    %v108 = vld [vmem:[#allocation2 + $0x248] sm:$0xff]
    %v109 = vld [vmem:[#allocation2 + $0x250] sm:$0xff]
    %v110 = vld [vmem:[#allocation2 + $0x258] sm:$0xff]
    %v111 = vld [vmem:[#allocation2 + $0x260] sm:$0xff]
    %v112 = vld [vmem:[#allocation2 + $0x268] sm:$0xff]
    %v113 = vld [vmem:[#allocation2 + $0x270] sm:$0xff]
    %v114 = vld [vmem:[#allocation2 + $0x278] sm:$0xff]
    %v115 = vld [vmem:[#allocation2 + $0x280] sm:$0xff]
    %v116 = vld [vmem:[#allocation2 + $0x288] sm:$0xff]
    %v117 = vld [vmem:[#allocation2 + $0x290] sm:$0xff]
    %v118 = vld [vmem:[#allocation2 + $0x298] sm:$0xff]
    %v119 = vld [vmem:[#allocation2 + $0x2a0] sm:$0xff]
    %v120 = vld [vmem:[#allocation2 + $0x2a8] sm:$0xff]
    %v121 = vld [vmem:[#allocation2 + $0x2b0] sm:$0xff]
    %v122 = vld [vmem:[#allocation2 + $0x2b8] sm:$0xff]
    %v123 = vld [vmem:[#allocation2 + $0x2c0] sm:$0xff]
    %v124 = vld [vmem:[#allocation2 + $0x2c8] sm:$0xff]
    %v125 = vld [vmem:[#allocation2 + $0x2d0] sm:$0xff]
    %v126 = vld [vmem:[#allocation2 + $0x2d8] sm:$0xff]
    %v127 = vld [vmem:[#allocation2 + $0x2e0] sm:$0xff]
    %v128 = vld [vmem:[#allocation2 + $0x2e8] sm:$0xff]
    %v129 = vld [vmem:[#allocation2 + $0x2f0] sm:$0xff]
    %v130 = vld [vmem:[#allocation2 + $0x2f8] sm:$0xff]
    %v131 = vld [vmem:[#allocation2 + $0x300] sm:$0xff]
    %v132 = vld [vmem:[#allocation2 + $0x308] sm:$0xff]
    %v133 = vld [vmem:[#allocation2 + $0x310] sm:$0xff]
    %v134 = vld [vmem:[#allocation2 + $0x318] sm:$0xff]
    %v135 = vld [vmem:[#allocation2 + $0x320] sm:$0xff]
    %v136 = vld [vmem:[#allocation2 + $0x328] sm:$0xff]
    %v137 = vld [vmem:[#allocation2 + $0x330] sm:$0xff]
    %v138 = vld [vmem:[#allocation2 + $0x338] sm:$0xff]
    %v139 = vld [vmem:[#allocation2 + $0x340] sm:$0xff]
    %v140 = vld [vmem:[#allocation2 + $0x348] sm:$0xff]
    %v141 = vld [vmem:[#allocation2 + $0x350] sm:$0xff]
    %v142 = vld [vmem:[#allocation2 + $0x358] sm:$0xff]
    %v143 = vld [vmem:[#allocation2 + $0x360] sm:$0xff]
    %v144 = vld [vmem:[#allocation2 + $0x368] sm:$0xff]
    %v145 = vld [vmem:[#allocation2 + $0x370] sm:$0xff]
    %v146 = vld [vmem:[#allocation2 + $0x378] sm:$0xff]
    %v147 = vld [vmem:[#allocation2 + $0x380] sm:$0xff]
    %v148 = vld [vmem:[#allocation2 + $0x388] sm:$0xff]
    %v149 = vld [vmem:[#allocation2 + $0x390] sm:$0xff]
    %v150 = vld [vmem:[#allocation2 + $0x398] sm:$0xff]
    %v151 = vld [vmem:[#allocation2 + $0x3a0] sm:$0xff]
    %v152 = vld [vmem:[#allocation2 + $0x3a8] sm:$0xff]
    %v153 = vld [vmem:[#allocation2 + $0x3b0] sm:$0xff]
    %v154 = vld [vmem:[#allocation2 + $0x3b8] sm:$0xff]
    %v155 = vld [vmem:[#allocation2 + $0x3c0] sm:$0xff]
    %v156 = vld [vmem:[#allocation2 + $0x3c8] sm:$0xff]
    %v157 = vld [vmem:[#allocation2 + $0x3d0] sm:$0xff]
    %v158 = vld [vmem:[#allocation2 + $0x3d8] sm:$0xff]
    %v159 = vld [vmem:[#allocation2 + $0x3e0] sm:$0xff]
    %v160 = vld [vmem:[#allocation2 + $0x3e8] sm:$0xff]
    %v161 = vld [vmem:[#allocation2 + $0x3f0] sm:$0xff]
    %v162 = vld [vmem:[#allocation2 + $0x3f8] sm:$0xff]
    %v163 = vadd.f32 %v35, %v36
    %v164 = vadd.f32 %v163, %v37
    %v165 = vadd.f32 %v164, %v38
    %v166 = vadd.f32 %v165, %v39
    %v167 = vadd.f32 %v166, %v40
    %v168 = vadd.f32 %v167, %v41
    %v169 = vadd.f32 %v168, %v42
    %v170 = vadd.f32 %v169, %v43
    %v171 = vadd.f32 %v170, %v44
    %v172 = vadd.f32 %v171, %v45
    %v173 = vadd.f32 %v172, %v46
    %v174 = vadd.f32 %v173, %v47
    %v175 = vadd.f32 %v174, %v48
    %v176 = vadd.f32 %v175, %v49
    %v177 = vadd.f32 %v176, %v50
    %178 = vadd.xlane.f32.xlu0 %v177
    %v179 = vpop.xlane.xlu0 %178
    %v180 = vadd.f32 %v51, %v52
    %v181 = vadd.f32 %v180, %v53
    %v182 = vadd.f32 %v181, %v54
    %v183 = vadd.f32 %v182, %v55
    %v184 = vadd.f32 %v183, %v56
    %v185 = vadd.f32 %v184, %v57
    %v186 = vadd.f32 %v185, %v58
    %v187 = vadd.f32 %v186, %v59
    %v188 = vadd.f32 %v187, %v60
    %v189 = vadd.f32 %v188, %v61
    %v190 = vadd.f32 %v189, %v62
    %v191 = vadd.f32 %v190, %v63
    %v192 = vadd.f32 %v191, %v64
    %v193 = vadd.f32 %v192, %v65
    %v194 = vadd.f32 %v193, %v66
    %195 = vadd.xlane.f32.xlu0 %v194
    %v196 = vpop.xlane.xlu0 %195
    %v197 = vadd.f32 %v67, %v68
    %v198 = vadd.f32 %v197, %v69
    %v199 = vadd.f32 %v198, %v70
    %v200 = vadd.f32 %v199, %v71
    %v201 = vadd.f32 %v200, %v72
    %v202 = vadd.f32 %v201, %v73
    %v203 = vadd.f32 %v202, %v74
    %v204 = vadd.f32 %v203, %v75
    %v205 = vadd.f32 %v204, %v76
    %v206 = vadd.f32 %v205, %v77
    %v207 = vadd.f32 %v206, %v78
    %v208 = vadd.f32 %v207, %v79
    %v209 = vadd.f32 %v208, %v80
    %v210 = vadd.f32 %v209, %v81
    %v211 = vadd.f32 %v210, %v82
    %212 = vadd.xlane.f32.xlu0 %v211
    %v213 = vpop.xlane.xlu0 %212
    %v214 = vadd.f32 %v83, %v84
    %v215 = vadd.f32 %v214, %v85
    %v216 = vadd.f32 %v215, %v86
    %v217 = vadd.f32 %v216, %v87
    %v218 = vadd.f32 %v217, %v88
    %v219 = vadd.f32 %v218, %v89
    %v220 = vadd.f32 %v219, %v90
    %v221 = vadd.f32 %v220, %v91
    %v222 = vadd.f32 %v221, %v92
    %v223 = vadd.f32 %v222, %v93
    %v224 = vadd.f32 %v223, %v94
    %v225 = vadd.f32 %v224, %v95
    %v226 = vadd.f32 %v225, %v96
    %v227 = vadd.f32 %v226, %v97
    %v228 = vadd.f32 %v227, %v98
    %229 = vadd.xlane.f32.xlu0 %v228
    %v230 = vpop.xlane.xlu0 %229
    %v231 = vadd.f32 %v99, %v100
    %v232 = vadd.f32 %v231, %v101
    %v233 = vadd.f32 %v232, %v102
    %v234 = vadd.f32 %v233, %v103
    %v235 = vadd.f32 %v234, %v104
    %v236 = vadd.f32 %v235, %v105
    %v237 = vadd.f32 %v236, %v106
    %v238 = vadd.f32 %v237, %v107
    %v239 = vadd.f32 %v238, %v108
    %v240 = vadd.f32 %v239, %v109
    %v241 = vadd.f32 %v240, %v110
    %v242 = vadd.f32 %v241, %v111
    %v243 = vadd.f32 %v242, %v112
    %v244 = vadd.f32 %v243, %v113
    %v245 = vadd.f32 %v244, %v114
    %246 = vadd.xlane.f32.xlu0 %v245
    %v247 = vpop.xlane.xlu0 %246
    %v248 = vadd.f32 %v115, %v116
    %v249 = vadd.f32 %v248, %v117
    %v250 = vadd.f32 %v249, %v118
    %v251 = vadd.f32 %v250, %v119
    %v252 = vadd.f32 %v251, %v120
    %v253 = vadd.f32 %v252, %v121
    %v254 = vadd.f32 %v253, %v122
    %v255 = vadd.f32 %v254, %v123
    %v256 = vadd.f32 %v255, %v124
    %v257 = vadd.f32 %v256, %v125
    %v258 = vadd.f32 %v257, %v126
    %v259 = vadd.f32 %v258, %v127
    %v260 = vadd.f32 %v259, %v128
    %v261 = vadd.f32 %v260, %v129
    %v262 = vadd.f32 %v261, %v130
    %263 = vadd.xlane.f32.xlu0 %v262
    %v264 = vpop.xlane.xlu0 %263
    %v265 = vadd.f32 %v131, %v132
    %v266 = vadd.f32 %v265, %v133
    %v267 = vadd.f32 %v266, %v134
    %v268 = vadd.f32 %v267, %v135
    %v269 = vadd.f32 %v268, %v136
    %v270 = vadd.f32 %v269, %v137
    %v271 = vadd.f32 %v270, %v138
    %v272 = vadd.f32 %v271, %v139
    %v273 = vadd.f32 %v272, %v140
    %v274 = vadd.f32 %v273, %v141
    %v275 = vadd.f32 %v274, %v142
    %v276 = vadd.f32 %v275, %v143
    %v277 = vadd.f32 %v276, %v144
    %v278 = vadd.f32 %v277, %v145
    %v279 = vadd.f32 %v278, %v146
    %280 = vadd.xlane.f32.xlu0 %v279
    %v281 = vpop.xlane.xlu0 %280
    %v282 = vadd.f32 %v147, %v148
    %v283 = vadd.f32 %v282, %v149
    %v284 = vadd.f32 %v283, %v150
    %v285 = vadd.f32 %v284, %v151
    %v286 = vadd.f32 %v285, %v152
    %v287 = vadd.f32 %v286, %v153
    %v288 = vadd.f32 %v287, %v154
    %v289 = vadd.f32 %v288, %v155
    %v290 = vadd.f32 %v289, %v156
    %v291 = vadd.f32 %v290, %v157
    %v292 = vadd.f32 %v291, %v158
    %v293 = vadd.f32 %v292, %v159
    %v294 = vadd.f32 %v293, %v160
    %v295 = vadd.f32 %v294, %v161
    %v296 = vadd.f32 %v295, %v162
    %297 = vadd.xlane.f32.xlu0 %v296
    %v298 = vpop.xlane.xlu0 %297
    %v299 = vrcp.pop 2048.0
    %v300 = vmul.f32 %v179, %v299
    %v301 = vmul.f32 %v196, %v299
    %v302 = vmul.f32 %v213, %v299
    %v303 = vmul.f32 %v230, %v299
    %v304 = vmul.f32 %v247, %v299
    %v305 = vmul.f32 %v264, %v299
    %v306 = vmul.f32 %v281, %v299
    %v307 = vmul.f32 %v298, %v299
    %v308 = vmax.f32 %v35, %v36
    %v309 = vmax.f32 %v308, %v37
    %v310 = vmax.f32 %v309, %v38
    %v311 = vmax.f32 %v310, %v39
    %v312 = vmax.f32 %v311, %v40
    %v313 = vmax.f32 %v312, %v41
    %v314 = vmax.f32 %v313, %v42
    %v315 = vmax.f32 %v314, %v43
    %v316 = vmax.f32 %v315, %v44
    %v317 = vmax.f32 %v316, %v45
    %v318 = vmax.f32 %v317, %v46
    %v319 = vmax.f32 %v318, %v47
    %v320 = vmax.f32 %v319, %v48
    %v321 = vmax.f32 %v320, %v49
    %v322 = vmax.f32 %v321, %v50
    %323 = vmax.xlane.f32.xlu0 %v322
    %v324 = vpop.xlane.xlu0 %323
    %v325 = vmax.f32 %v51, %v52
    %v326 = vmax.f32 %v325, %v53
    %v327 = vmax.f32 %v326, %v54
    %v328 = vmax.f32 %v327, %v55
    %v329 = vmax.f32 %v328, %v56
    %v330 = vmax.f32 %v329, %v57
    %v331 = vmax.f32 %v330, %v58
    %v332 = vmax.f32 %v331, %v59
    %v333 = vmax.f32 %v332, %v60
    %v334 = vmax.f32 %v333, %v61
    %v335 = vmax.f32 %v334, %v62
    %v336 = vmax.f32 %v335, %v63
    %v337 = vmax.f32 %v336, %v64
    %v338 = vmax.f32 %v337, %v65
    %v339 = vmax.f32 %v338, %v66
    %340 = vmax.xlane.f32.xlu0 %v339
    %v341 = vpop.xlane.xlu0 %340
    %v342 = vmax.f32 %v67, %v68
    %v343 = vmax.f32 %v342, %v69
    %v344 = vmax.f32 %v343, %v70
    %v345 = vmax.f32 %v344, %v71
    %v346 = vmax.f32 %v345, %v72
    %v347 = vmax.f32 %v346, %v73
    %v348 = vmax.f32 %v347, %v74
    %v349 = vmax.f32 %v348, %v75
    %v350 = vmax.f32 %v349, %v76
    %v351 = vmax.f32 %v350, %v77
    %v352 = vmax.f32 %v351, %v78
    %v353 = vmax.f32 %v352, %v79
    %v354 = vmax.f32 %v353, %v80
    %v355 = vmax.f32 %v354, %v81
    %v356 = vmax.f32 %v355, %v82
    %357 = vmax.xlane.f32.xlu0 %v356
    %v358 = vpop.xlane.xlu0 %357
    %v359 = vmax.f32 %v83, %v84
    %v360 = vmax.f32 %v359, %v85
    %v361 = vmax.f32 %v360, %v86
    %v362 = vmax.f32 %v361, %v87
    %v363 = vmax.f32 %v362, %v88
    %v364 = vmax.f32 %v363, %v89
    %v365 = vmax.f32 %v364, %v90
    %v366 = vmax.f32 %v365, %v91
    %v367 = vmax.f32 %v366, %v92
    %v368 = vmax.f32 %v367, %v93
    %v369 = vmax.f32 %v368, %v94
    %v370 = vmax.f32 %v369, %v95
    %v371 = vmax.f32 %v370, %v96
    %v372 = vmax.f32 %v371, %v97
    %v373 = vmax.f32 %v372, %v98
    %374 = vmax.xlane.f32.xlu0 %v373
    %v375 = vpop.xlane.xlu0 %374
    %v376 = vmax.f32 %v99, %v100
    %v377 = vmax.f32 %v376, %v101
    %v378 = vmax.f32 %v377, %v102
    %v379 = vmax.f32 %v378, %v103
    %v380 = vmax.f32 %v379, %v104
    %v381 = vmax.f32 %v380, %v105
    %v382 = vmax.f32 %v381, %v106
    %v383 = vmax.f32 %v382, %v107
    %v384 = vmax.f32 %v383, %v108
    %v385 = vmax.f32 %v384, %v109
    %v386 = vmax.f32 %v385, %v110
    %v387 = vmax.f32 %v386, %v111
    %v388 = vmax.f32 %v387, %v112
    %v389 = vmax.f32 %v388, %v113
    %v390 = vmax.f32 %v389, %v114
    %391 = vmax.xlane.f32.xlu0 %v390
    %v392 = vpop.xlane.xlu0 %391
    %v393 = vmax.f32 %v115, %v116
    %v394 = vmax.f32 %v393, %v117
    %v395 = vmax.f32 %v394, %v118
    %v396 = vmax.f32 %v395, %v119
    %v397 = vmax.f32 %v396, %v120
    %v398 = vmax.f32 %v397, %v121
    %v399 = vmax.f32 %v398, %v122
    %v400 = vmax.f32 %v399, %v123
    %v401 = vmax.f32 %v400, %v124
    %v402 = vmax.f32 %v401, %v125
    %v403 = vmax.f32 %v402, %v126
    %v404 = vmax.f32 %v403, %v127
    %v405 = vmax.f32 %v404, %v128
    %v406 = vmax.f32 %v405, %v129
    %v407 = vmax.f32 %v406, %v130
    %408 = vmax.xlane.f32.xlu0 %v407
    %v409 = vpop.xlane.xlu0 %408
    %v410 = vmax.f32 %v131, %v132
    %v411 = vmax.f32 %v410, %v133
    %v412 = vmax.f32 %v411, %v134
    %v413 = vmax.f32 %v412, %v135
    %v414 = vmax.f32 %v413, %v136
    %v415 = vmax.f32 %v414, %v137
    %v416 = vmax.f32 %v415, %v138
    %v417 = vmax.f32 %v416, %v139
    %v418 = vmax.f32 %v417, %v140
    %v419 = vmax.f32 %v418, %v141
    %v420 = vmax.f32 %v419, %v142
    %v421 = vmax.f32 %v420, %v143
    %v422 = vmax.f32 %v421, %v144
    %v423 = vmax.f32 %v422, %v145
    %v424 = vmax.f32 %v423, %v146
    %425 = vmax.xlane.f32.xlu0 %v424
    %v426 = vpop.xlane.xlu0 %425
    %v427 = vmax.f32 %v147, %v148
    %v428 = vmax.f32 %v427, %v149
    %v429 = vmax.f32 %v428, %v150
    %v430 = vmax.f32 %v429, %v151
    %v431 = vmax.f32 %v430, %v152
    %v432 = vmax.f32 %v431, %v153
    %v433 = vmax.f32 %v432, %v154
    %v434 = vmax.f32 %v433, %v155
    %v435 = vmax.f32 %v434, %v156
    %v436 = vmax.f32 %v435, %v157
    %v437 = vmax.f32 %v436, %v158
    %v438 = vmax.f32 %v437, %v159
    %v439 = vmax.f32 %v438, %v160
    %v440 = vmax.f32 %v439, %v161
    %v441 = vmax.f32 %v440, %v162
    %442 = vmax.xlane.f32.xlu0 %v441
    %v443 = vpop.xlane.xlu0 %442
    %v452 = vlaneseq
    %v453 = vand.u32 %v452, 127
    %v454 = vlaneseq
    %v455 = vshrl.u32 %v454, 7
    %v456 = vsub.s32 %v453, %v455
    %v457 = vrot.slane %v300, %v456
    %v458 = vadd.s32 %v453, 4294967288
    %v459 = vlaneseq
    %v460 = vshrl.u32 %v459, 7
    %v461 = vsub.s32 %v458, %v460
    %v462 = vrot.slane %v301, %v461
    %vm463 = vcmask 130112
    %v464 = vsel %vm463, %v462, %v457
    %v465 = vadd.s32 %v453, 4294967280
    %v466 = vlaneseq
    %v467 = vshrl.u32 %v466, 7
    %v468 = vsub.s32 %v465, %v467
    %v469 = vrot.slane %v302, %v468
    %vm470 = vcmask 195712
    %v471 = vsel %vm470, %v469, %v464
    %v472 = vadd.s32 %v453, 4294967272
    %v473 = vlaneseq
    %v474 = vshrl.u32 %v473, 7
    %v475 = vsub.s32 %v472, %v474
    %v476 = vrot.slane %v303, %v475
    %vm477 = vcmask 261312
    %v478 = vsel %vm477, %v476, %v471
    %v479 = vlaneseq
    %v480 = vshrl.u32 %v479, 7
    %v481 = vsub.s32 %v453, %v480
    %v482 = vrot.slane %v304, %v481
    %v483 = vlaneseq
    %v484 = vshrl.u32 %v483, 7
    %v485 = vsub.s32 %v458, %v484
    %v486 = vrot.slane %v305, %v485
    %v487 = vsel %vm463, %v486, %v482
    %v488 = vlaneseq
    %v489 = vshrl.u32 %v488, 7
    %v490 = vsub.s32 %v465, %v489
    %v491 = vrot.slane %v306, %v490
    %v492 = vsel %vm470, %v491, %v487
    %v493 = vlaneseq
    %v494 = vshrl.u32 %v493, 7
    %v495 = vsub.s32 %v472, %v494
    %v496 = vrot.slane %v307, %v495
    %v497 = vsel %vm477, %v496, %v492
    %vm498 = vcmask 1041409
    %v499 = vsel %vm498, %v497, %v478
    %v509 = vlaneseq
    %v510 = vshrl.u32 %v509, 7
    %v511 = vsub.s32 %v453, %v510
    %v512 = vrot.slane %v324, %v511
    %v513 = vlaneseq
    %v514 = vshrl.u32 %v513, 7
    %v515 = vsub.s32 %v458, %v514
    %v516 = vrot.slane %v341, %v515
    %v517 = vsel %vm463, %v516, %v512
    %v518 = vlaneseq
    %v519 = vshrl.u32 %v518, 7
    %v520 = vsub.s32 %v465, %v519
    %v521 = vrot.slane %v358, %v520
    %v522 = vsel %vm470, %v521, %v517
    %v523 = vlaneseq
    %v524 = vshrl.u32 %v523, 7
    %v525 = vsub.s32 %v472, %v524
    %v526 = vrot.slane %v375, %v525
    %v527 = vsel %vm477, %v526, %v522
    %v528 = vlaneseq
    %v529 = vshrl.u32 %v528, 7
    %v530 = vsub.s32 %v453, %v529
    %v531 = vrot.slane %v392, %v530
    %v532 = vlaneseq
    %v533 = vshrl.u32 %v532, 7
    %v534 = vsub.s32 %v458, %v533
    %v535 = vrot.slane %v409, %v534
    %v536 = vsel %vm463, %v535, %v531
    %v537 = vlaneseq
    %v538 = vshrl.u32 %v537, 7
    %v539 = vsub.s32 %v465, %v538
    %v540 = vrot.slane %v426, %v539
    %v541 = vsel %vm470, %v540, %v536
    %v542 = vlaneseq
    %v543 = vshrl.u32 %v542, 7
    %v544 = vsub.s32 %v472, %v543
    %v545 = vrot.slane %v443, %v544
    %v546 = vsel %vm477, %v545, %v541
    %vm547 = vcmask 1043459
    %v548 = vsel %vm547, %v546, %v527
    %vm550 = vcmask 1041408
    %v551 = vsel %vm550, %v499, %v548
    %v552 = vld [vmem:[%s1] sm:$0xff]
    %v553 = vld [vmem:[%s1 + $0x8] sm:$0xff]
    %v554 = vld [vmem:[%s1 + $0x10] sm:$0xff]
    %v555 = vld [vmem:[%s1 + $0x18] sm:$0xff]
    %v556 = vld [vmem:[%s2] sm:$0x1]
    %v558 = vlaneseq
    %v559 = vshrl.u32 %v558, 7
    %v560 = vsub.s32 0, %v559
    %v561 = vrot.slane %v556, %v560
    %vm563 = vcmask 261120
    %v565 = vsel %vm563, %v551, 0
    %567 = vmatprep.subr.mxu0 0.0
    %568 = vmatpush1.msra.mxu0 %v552
    %569 = vmatprep.subr.mxu0 0.0
    %570 = vmatpush1.msra.mxu0 %v553
    %571 = vmatprep.subr.mxu0 0.0
    %572 = vmatpush1.msra.mxu0 %v554
    %573 = vmatprep.subr.mxu0 0.0
    %574 = vmatpush1.msra.mxu0 %v555
    %575 = vmatprep.subr.mxu0 0.0
    %576 = vmatpush1.msra.mxu0 0.0
    %577 = vmatprep.subr.mxu0 0.0
    %578 = vmatpush1.msra.mxu0 0.0
    %579 = vmatprep.subr.mxu0 0.0
    %580 = vmatpush1.msra.mxu0 0.0
    %581 = vmatprep.subr.mxu0 0.0
    %582 = vmatpush1.msra.mxu0 0.0
    %583 = vmatprep.subr.mxu0 0.0
    %584 = vmatpush1.msra.mxu0 0.0
    %585 = vmatprep.subr.mxu0 0.0
    %586 = vmatpush1.msra.mxu0 0.0
    %587 = vmatprep.subr.mxu0 0.0
    %588 = vmatpush1.msra.mxu0 0.0
    %589 = vmatprep.subr.mxu0 0.0
    %590 = vmatpush1.msra.mxu0 0.0
    %591 = vmatprep.subr.mxu0 0.0
    %592 = vmatpush1.msra.mxu0 0.0
    %593 = vmatprep.subr.mxu0 0.0
    %594 = vmatpush1.msra.mxu0 0.0
    %595 = vmatprep.subr.mxu0 0.0
    %596 = vmatpush1.msra.mxu0 0.0
    %597 = vmatprep.subr.mxu0 0.0
    %598 = vmatpush1.msra.mxu0 0.0
    %599 = vmatprep.subr.mxu0 0.0
    %600 = vmatpush1.msra.mxu0 0.0
    %601 = vmatprep.subr.mxu0 0.0
    %602 = vmatpush1.msra.mxu0 0.0
    %603 = vmatprep.subr.mxu0 0.0
    %604 = vmatpush1.msra.mxu0 0.0
    %605 = vmatprep.subr.mxu0 0.0
    %606 = vmatpush1.msra.mxu0 0.0
    %607 = vmatprep.subr.mxu0 0.0
    %608 = vmatpush1.msra.mxu0 0.0
    %609 = vmatprep.subr.mxu0 0.0
    %610 = vmatpush1.msra.mxu0 0.0
    %611 = vmatprep.subr.mxu0 0.0
    %612 = vmatpush1.msra.mxu0 0.0
    %613 = vmatprep.subr.mxu0 0.0
    %614 = vmatpush1.msra.mxu0 0.0
    %615 = vmatprep.subr.mxu0 0.0
    %616 = vmatpush1.msra.mxu0 0.0
    %617 = vmatprep.subr.mxu0 0.0
    %618 = vmatpush1.msra.mxu0 0.0
    %619 = vmatprep.subr.mxu0 0.0
    %620 = vmatpush1.msra.mxu0 0.0
    %621 = vmatprep.subr.mxu0 0.0
    %622 = vmatpush1.msra.mxu0 0.0
    %623 = vmatprep.subr.mxu0 0.0
    %624 = vmatpush1.msra.mxu0 0.0
    %625 = vmatprep.subr.mxu0 0.0
    %626 = vmatpush1.msra.mxu0 0.0
    %627 = vmatprep.subr.mxu0 0.0
    %628 = vmatpush1.msra.mxu0 0.0
    %629 = vmatprep.subr.mxu0 0.0
    %630 = vmatpush1.msra.mxu0 0.0
    %631 = vmatprep.mubr.f32.mxu0 0.0
    %632 = vmatmul.mubr.f32.gmra.mrb[0].mxu0 %v565
    %v633 = vpop.f32.mrb[0].mxu0
    %v634 = vadd.f32 %v561, %v633
    %v635 = vpop.f32.mrb[0].mxu0
    %636 = vdwg.mxu0
    %v637 = vmax.f32 %v634, 0.0
    %v638 = vld [vmem:[%s3] sm:$0x3]
    %v639 = vld [vmem:[%s4] sm:$0x1]
    %v641 = vlaneseq
    %v642 = vshrl.u32 %v641, 7
    %v643 = vsub.s32 0, %v642
    %v644 = vrot.slane %v639, %v643
    %vm646 = vcmask 15360
    %v648 = vsel %vm646, %v637, 0
    %v651 = vsel %vm550, %v638, 0
    %653 = vmatprep.subr.mxu0 0.0
    %654 = vmatpush1.msra.mxu0 %v651
    %655 = vmatprep.subr.mxu0 0.0
    %656 = vmatpush1.msra.mxu0 0.0
    %657 = vmatprep.subr.mxu0 0.0
    %658 = vmatpush1.msra.mxu0 0.0
    %659 = vmatprep.subr.mxu0 0.0
    %660 = vmatpush1.msra.mxu0 0.0
    %661 = vmatprep.subr.mxu0 0.0
    %662 = vmatpush1.msra.mxu0 0.0
    %663 = vmatprep.subr.mxu0 0.0
    %664 = vmatpush1.msra.mxu0 0.0
    %665 = vmatprep.subr.mxu0 0.0
    %666 = vmatpush1.msra.mxu0 0.0
    %667 = vmatprep.subr.mxu0 0.0
    %668 = vmatpush1.msra.mxu0 0.0
    %669 = vmatprep.subr.mxu0 0.0
    %670 = vmatpush1.msra.mxu0 0.0
    %671 = vmatprep.subr.mxu0 0.0
    %672 = vmatpush1.msra.mxu0 0.0
    %673 = vmatprep.subr.mxu0 0.0
    %674 = vmatpush1.msra.mxu0 0.0
    %675 = vmatprep.subr.mxu0 0.0
    %676 = vmatpush1.msra.mxu0 0.0
    %677 = vmatprep.subr.mxu0 0.0
    %678 = vmatpush1.msra.mxu0 0.0
    %679 = vmatprep.subr.mxu0 0.0
    %680 = vmatpush1.msra.mxu0 0.0
    %681 = vmatprep.subr.mxu0 0.0
    %682 = vmatpush1.msra.mxu0 0.0
    %683 = vmatprep.subr.mxu0 0.0
    %684 = vmatpush1.msra.mxu0 0.0
    %685 = vmatprep.subr.mxu0 0.0
    %686 = vmatpush1.msra.mxu0 0.0
    %687 = vmatprep.subr.mxu0 0.0
    %688 = vmatpush1.msra.mxu0 0.0
    %689 = vmatprep.subr.mxu0 0.0
    %690 = vmatpush1.msra.mxu0 0.0
    %691 = vmatprep.subr.mxu0 0.0
    %692 = vmatpush1.msra.mxu0 0.0
    %693 = vmatprep.subr.mxu0 0.0
    %694 = vmatpush1.msra.mxu0 0.0
    %695 = vmatprep.subr.mxu0 0.0
    %696 = vmatpush1.msra.mxu0 0.0
    %697 = vmatprep.subr.mxu0 0.0
    %698 = vmatpush1.msra.mxu0 0.0
    %699 = vmatprep.subr.mxu0 0.0
    %700 = vmatpush1.msra.mxu0 0.0
    %701 = vmatprep.subr.mxu0 0.0
    %702 = vmatpush1.msra.mxu0 0.0
    %703 = vmatprep.subr.mxu0 0.0
    %704 = vmatpush1.msra.mxu0 0.0
    %705 = vmatprep.subr.mxu0 0.0
    %706 = vmatpush1.msra.mxu0 0.0
    %707 = vmatprep.subr.mxu0 0.0
    %708 = vmatpush1.msra.mxu0 0.0
    %709 = vmatprep.subr.mxu0 0.0
    %710 = vmatpush1.msra.mxu0 0.0
    %711 = vmatprep.subr.mxu0 0.0
    %712 = vmatpush1.msra.mxu0 0.0
    %713 = vmatprep.subr.mxu0 0.0
    %714 = vmatpush1.msra.mxu0 0.0
    %715 = vmatprep.subr.mxu0 0.0
    %716 = vmatpush1.msra.mxu0 0.0
    %717 = vmatprep.mubr.f32.mxu0 0.0
    %718 = vmatmul.mubr.f32.gmra.mrb[0].mxu0 %v648
    %v719 = vpop.f32.mrb[0].mxu0
    %v720 = vadd.f32 %v644, %v719
    %v721 = vpop.f32.mrb[0].mxu0
    %722 = vdwg.mxu0
    %v724 = vrot.slane %v720, 2
    %v726 = vadd.f32 %v720, %v724
    %v727 = vxor.u32 %v726, 2147483648
    %v728 = vmul.f32 %v727, 1.442695
    %v729 = vpow.pop %v728
    %v730 = vadd.f32 %v729, 1.0
    %v731 = vrcp.pop %v730
    %v732 = vmul.f32 1.0, %v731
    %v733 = vlaneseq
    %v734 = vshrl.u32 %v733, 7
    %v735 = vsub.s32 0, %v734
    %v736 = vrot.slane %v732, %v735
    %738 = vbcast.lane.b32.xlu0 %v736, 256
    %v739 = vpop.permute.xlu0 %738
    %s741 = sor.u32 256, 8
    %742 = vbcast.lane.b32.xlu0 %v736, %s741
    %v743 = vpop.permute.xlu0 %742
    %s745 = sor.u32 256, 16
    %746 = vbcast.lane.b32.xlu0 %v736, %s745
    %v747 = vpop.permute.xlu0 %746
    %s749 = sor.u32 256, 24
    %750 = vbcast.lane.b32.xlu0 %v736, %s749
    %v751 = vpop.permute.xlu0 %750
    %v752 = vlaneseq
    %v753 = vshrl.u32 %v752, 7
    %v754 = vsub.s32 1, %v753
    %v755 = vrot.slane %v732, %v754
    %757 = vbcast.lane.b32.xlu0 %v755, 256
    %v758 = vpop.permute.xlu0 %757
    %s760 = sor.u32 256, 8
    %761 = vbcast.lane.b32.xlu0 %v755, %s760
    %v762 = vpop.permute.xlu0 %761
    %s764 = sor.u32 256, 16
    %765 = vbcast.lane.b32.xlu0 %v755, %s764
    %v766 = vpop.permute.xlu0 %765
    %s768 = sor.u32 256, 24
    %769 = vbcast.lane.b32.xlu0 %v755, %s768
    %v770 = vpop.permute.xlu0 %769
    %v771 = vmul.f32 %v35, %v739
    %v772 = vmul.f32 %v36, %v739
    %v773 = vmul.f32 %v37, %v739
    %v774 = vmul.f32 %v38, %v739
    %v775 = vmul.f32 %v39, %v739
    %v776 = vmul.f32 %v40, %v739
    %v777 = vmul.f32 %v41, %v739
    %v778 = vmul.f32 %v42, %v739
    %v779 = vmul.f32 %v43, %v739
    %v780 = vmul.f32 %v44, %v739
    %v781 = vmul.f32 %v45, %v739
    %v782 = vmul.f32 %v46, %v739
    %v783 = vmul.f32 %v47, %v739
    %v784 = vmul.f32 %v48, %v739
    %v785 = vmul.f32 %v49, %v739
    %v786 = vmul.f32 %v50, %v739
    %v787 = vmul.f32 %v51, %v743
    %v788 = vmul.f32 %v52, %v743
    %v789 = vmul.f32 %v53, %v743
    %v790 = vmul.f32 %v54, %v743
    %v791 = vmul.f32 %v55, %v743
    %v792 = vmul.f32 %v56, %v743
    %v793 = vmul.f32 %v57, %v743
    %v794 = vmul.f32 %v58, %v743
    %v795 = vmul.f32 %v59, %v743
    %v796 = vmul.f32 %v60, %v743
    %v797 = vmul.f32 %v61, %v743
    %v798 = vmul.f32 %v62, %v743
    %v799 = vmul.f32 %v63, %v743
    %v800 = vmul.f32 %v64, %v743
    %v801 = vmul.f32 %v65, %v743
    %v802 = vmul.f32 %v66, %v743
    %v803 = vmul.f32 %v67, %v747
    %v804 = vmul.f32 %v68, %v747
    %v805 = vmul.f32 %v69, %v747
    %v806 = vmul.f32 %v70, %v747
    %v807 = vmul.f32 %v71, %v747
    %v808 = vmul.f32 %v72, %v747
    %v809 = vmul.f32 %v73, %v747
    %v810 = vmul.f32 %v74, %v747
    %v811 = vmul.f32 %v75, %v747
    %v812 = vmul.f32 %v76, %v747
    %v813 = vmul.f32 %v77, %v747
    %v814 = vmul.f32 %v78, %v747
    %v815 = vmul.f32 %v79, %v747
    %v816 = vmul.f32 %v80, %v747
    %v817 = vmul.f32 %v81, %v747
    %v818 = vmul.f32 %v82, %v747
    %v819 = vmul.f32 %v83, %v751
    %v820 = vmul.f32 %v84, %v751
    %v821 = vmul.f32 %v85, %v751
    %v822 = vmul.f32 %v86, %v751
    %v823 = vmul.f32 %v87, %v751
    %v824 = vmul.f32 %v88, %v751
    %v825 = vmul.f32 %v89, %v751
    %v826 = vmul.f32 %v90, %v751
    %v827 = vmul.f32 %v91, %v751
    %v828 = vmul.f32 %v92, %v751
    %v829 = vmul.f32 %v93, %v751
    %v830 = vmul.f32 %v94, %v751
    %v831 = vmul.f32 %v95, %v751
    %v832 = vmul.f32 %v96, %v751
    %v833 = vmul.f32 %v97, %v751
    %v834 = vmul.f32 %v98, %v751
    %v835 = vmul.f32 %v99, %v758
    %v836 = vmul.f32 %v100, %v758
    %v837 = vmul.f32 %v101, %v758
    %v838 = vmul.f32 %v102, %v758
    %v839 = vmul.f32 %v103, %v758
    %v840 = vmul.f32 %v104, %v758
    %v841 = vmul.f32 %v105, %v758
    %v842 = vmul.f32 %v106, %v758
    %v843 = vmul.f32 %v107, %v758
    %v844 = vmul.f32 %v108, %v758
    %v845 = vmul.f32 %v109, %v758
    %v846 = vmul.f32 %v110, %v758
    %v847 = vmul.f32 %v111, %v758
    %v848 = vmul.f32 %v112, %v758
    %v849 = vmul.f32 %v113, %v758
    %v850 = vmul.f32 %v114, %v758
    %v851 = vmul.f32 %v115, %v762
    %v852 = vmul.f32 %v116, %v762
    %v853 = vmul.f32 %v117, %v762
    %v854 = vmul.f32 %v118, %v762
    %v855 = vmul.f32 %v119, %v762
    %v856 = vmul.f32 %v120, %v762
    %v857 = vmul.f32 %v121, %v762
    %v858 = vmul.f32 %v122, %v762
    %v859 = vmul.f32 %v123, %v762
    %v860 = vmul.f32 %v124, %v762
    %v861 = vmul.f32 %v125, %v762
    %v862 = vmul.f32 %v126, %v762
    %v863 = vmul.f32 %v127, %v762
    %v864 = vmul.f32 %v128, %v762
    %v865 = vmul.f32 %v129, %v762
    %v866 = vmul.f32 %v130, %v762
    %v867 = vmul.f32 %v131, %v766
    %v868 = vmul.f32 %v132, %v766
    %v869 = vmul.f32 %v133, %v766
    %v870 = vmul.f32 %v134, %v766
    %v871 = vmul.f32 %v135, %v766
    %v872 = vmul.f32 %v136, %v766
    %v873 = vmul.f32 %v137, %v766
    %v874 = vmul.f32 %v138, %v766
    %v875 = vmul.f32 %v139, %v766
    %v876 = vmul.f32 %v140, %v766
    %v877 = vmul.f32 %v141, %v766
    %v878 = vmul.f32 %v142, %v766
    %v879 = vmul.f32 %v143, %v766
    %v880 = vmul.f32 %v144, %v766
    %v881 = vmul.f32 %v145, %v766
    %v882 = vmul.f32 %v146, %v766
    %v883 = vmul.f32 %v147, %v770
    %v884 = vmul.f32 %v148, %v770
    %v885 = vmul.f32 %v149, %v770
    %v886 = vmul.f32 %v150, %v770
    %v887 = vmul.f32 %v151, %v770
    %v888 = vmul.f32 %v152, %v770
    %v889 = vmul.f32 %v153, %v770
    %v890 = vmul.f32 %v154, %v770
    %v891 = vmul.f32 %v155, %v770
    %v892 = vmul.f32 %v156, %v770
    %v893 = vmul.f32 %v157, %v770
    %v894 = vmul.f32 %v158, %v770
    %v895 = vmul.f32 %v159, %v770
    %v896 = vmul.f32 %v160, %v770
    %v897 = vmul.f32 %v161, %v770
    %v898 = vmul.f32 %v162, %v770
    %899 = vst [vmem:[#allocation5] sm:$0xff] %v771
    %900 = vst [vmem:[#allocation5 + $0x8] sm:$0xff] %v772
    %901 = vst [vmem:[#allocation5 + $0x10] sm:$0xff] %v773
    %902 = vst [vmem:[#allocation5 + $0x18] sm:$0xff] %v774
    %903 = vst [vmem:[#allocation5 + $0x20] sm:$0xff] %v775
    %904 = vst [vmem:[#allocation5 + $0x28] sm:$0xff] %v776
    %905 = vst [vmem:[#allocation5 + $0x30] sm:$0xff] %v777
    %906 = vst [vmem:[#allocation5 + $0x38] sm:$0xff] %v778
    %907 = vst [vmem:[#allocation5 + $0x40] sm:$0xff] %v779
    %908 = vst [vmem:[#allocation5 + $0x48] sm:$0xff] %v780
    %909 = vst [vmem:[#allocation5 + $0x50] sm:$0xff] %v781
    %910 = vst [vmem:[#allocation5 + $0x58] sm:$0xff] %v782
    %911 = vst [vmem:[#allocation5 + $0x60] sm:$0xff] %v783
    %912 = vst [vmem:[#allocation5 + $0x68] sm:$0xff] %v784
    %913 = vst [vmem:[#allocation5 + $0x70] sm:$0xff] %v785
    %914 = vst [vmem:[#allocation5 + $0x78] sm:$0xff] %v786
    %915 = vst [vmem:[#allocation5 + $0x80] sm:$0xff] %v787
    %916 = vst [vmem:[#allocation5 + $0x88] sm:$0xff] %v788
    %917 = vst [vmem:[#allocation5 + $0x90] sm:$0xff] %v789
    %918 = vst [vmem:[#allocation5 + $0x98] sm:$0xff] %v790
    %919 = vst [vmem:[#allocation5 + $0xa0] sm:$0xff] %v791
    %920 = vst [vmem:[#allocation5 + $0xa8] sm:$0xff] %v792
    %921 = vst [vmem:[#allocation5 + $0xb0] sm:$0xff] %v793
    %922 = vst [vmem:[#allocation5 + $0xb8] sm:$0xff] %v794
    %923 = vst [vmem:[#allocation5 + $0xc0] sm:$0xff] %v795
    %924 = vst [vmem:[#allocation5 + $0xc8] sm:$0xff] %v796
    %925 = vst [vmem:[#allocation5 + $0xd0] sm:$0xff] %v797
    %926 = vst [vmem:[#allocation5 + $0xd8] sm:$0xff] %v798
    %927 = vst [vmem:[#allocation5 + $0xe0] sm:$0xff] %v799
    %928 = vst [vmem:[#allocation5 + $0xe8] sm:$0xff] %v800
    %929 = vst [vmem:[#allocation5 + $0xf0] sm:$0xff] %v801
    %930 = vst [vmem:[#allocation5 + $0xf8] sm:$0xff] %v802
    %931 = vst [vmem:[#allocation5 + $0x100] sm:$0xff] %v803
    %932 = vst [vmem:[#allocation5 + $0x108] sm:$0xff] %v804
    %933 = vst [vmem:[#allocation5 + $0x110] sm:$0xff] %v805
    %934 = vst [vmem:[#allocation5 + $0x118] sm:$0xff] %v806
    %935 = vst [vmem:[#allocation5 + $0x120] sm:$0xff] %v807
    %936 = vst [vmem:[#allocation5 + $0x128] sm:$0xff] %v808
    %937 = vst [vmem:[#allocation5 + $0x130] sm:$0xff] %v809
    %938 = vst [vmem:[#allocation5 + $0x138] sm:$0xff] %v810
    %939 = vst [vmem:[#allocation5 + $0x140] sm:$0xff] %v811
    %940 = vst [vmem:[#allocation5 + $0x148] sm:$0xff] %v812
    %941 = vst [vmem:[#allocation5 + $0x150] sm:$0xff] %v813
    %942 = vst [vmem:[#allocation5 + $0x158] sm:$0xff] %v814
    %943 = vst [vmem:[#allocation5 + $0x160] sm:$0xff] %v815
    %944 = vst [vmem:[#allocation5 + $0x168] sm:$0xff] %v816
    %945 = vst [vmem:[#allocation5 + $0x170] sm:$0xff] %v817
    %946 = vst [vmem:[#allocation5 + $0x178] sm:$0xff] %v818
    %947 = vst [vmem:[#allocation5 + $0x180] sm:$0xff] %v819
    %948 = vst [vmem:[#allocation5 + $0x188] sm:$0xff] %v820
    %949 = vst [vmem:[#allocation5 + $0x190] sm:$0xff] %v821
    %950 = vst [vmem:[#allocation5 + $0x198] sm:$0xff] %v822
    %951 = vst [vmem:[#allocation5 + $0x1a0] sm:$0xff] %v823
    %952 = vst [vmem:[#allocation5 + $0x1a8] sm:$0xff] %v824
    %953 = vst [vmem:[#allocation5 + $0x1b0] sm:$0xff] %v825
    %954 = vst [vmem:[#allocation5 + $0x1b8] sm:$0xff] %v826
    %955 = vst [vmem:[#allocation5 + $0x1c0] sm:$0xff] %v827
    %956 = vst [vmem:[#allocation5 + $0x1c8] sm:$0xff] %v828
    %957 = vst [vmem:[#allocation5 + $0x1d0] sm:$0xff] %v829
    %958 = vst [vmem:[#allocation5 + $0x1d8] sm:$0xff] %v830
    %959 = vst [vmem:[#allocation5 + $0x1e0] sm:$0xff] %v831
    %960 = vst [vmem:[#allocation5 + $0x1e8] sm:$0xff] %v832
    %961 = vst [vmem:[#allocation5 + $0x1f0] sm:$0xff] %v833
    %962 = vst [vmem:[#allocation5 + $0x1f8] sm:$0xff] %v834
    %963 = vst [vmem:[#allocation5 + $0x200] sm:$0xff] %v835
    %964 = vst [vmem:[#allocation5 + $0x208] sm:$0xff] %v836
    %965 = vst [vmem:[#allocation5 + $0x210] sm:$0xff] %v837
    %966 = vst [vmem:[#allocation5 + $0x218] sm:$0xff] %v838
    %967 = vst [vmem:[#allocation5 + $0x220] sm:$0xff] %v839
    %968 = vst [vmem:[#allocation5 + $0x228] sm:$0xff] %v840
    %969 = vst [vmem:[#allocation5 + $0x230] sm:$0xff] %v841
    %970 = vst [vmem:[#allocation5 + $0x238] sm:$0xff] %v842
    %971 = vst [vmem:[#allocation5 + $0x240] sm:$0xff] %v843
    %972 = vst [vmem:[#allocation5 + $0x248] sm:$0xff] %v844
    %973 = vst [vmem:[#allocation5 + $0x250] sm:$0xff] %v845
    %974 = vst [vmem:[#allocation5 + $0x258] sm:$0xff] %v846
    %975 = vst [vmem:[#allocation5 + $0x260] sm:$0xff] %v847
    %976 = vst [vmem:[#allocation5 + $0x268] sm:$0xff] %v848
    %977 = vst [vmem:[#allocation5 + $0x270] sm:$0xff] %v849
    %978 = vst [vmem:[#allocation5 + $0x278] sm:$0xff] %v850
    %979 = vst [vmem:[#allocation5 + $0x280] sm:$0xff] %v851
    %980 = vst [vmem:[#allocation5 + $0x288] sm:$0xff] %v852
    %981 = vst [vmem:[#allocation5 + $0x290] sm:$0xff] %v853
    %982 = vst [vmem:[#allocation5 + $0x298] sm:$0xff] %v854
    %983 = vst [vmem:[#allocation5 + $0x2a0] sm:$0xff] %v855
    %984 = vst [vmem:[#allocation5 + $0x2a8] sm:$0xff] %v856
    %985 = vst [vmem:[#allocation5 + $0x2b0] sm:$0xff] %v857
    %986 = vst [vmem:[#allocation5 + $0x2b8] sm:$0xff] %v858
    %987 = vst [vmem:[#allocation5 + $0x2c0] sm:$0xff] %v859
    %988 = vst [vmem:[#allocation5 + $0x2c8] sm:$0xff] %v860
    %989 = vst [vmem:[#allocation5 + $0x2d0] sm:$0xff] %v861
    %990 = vst [vmem:[#allocation5 + $0x2d8] sm:$0xff] %v862
    %991 = vst [vmem:[#allocation5 + $0x2e0] sm:$0xff] %v863
    %992 = vst [vmem:[#allocation5 + $0x2e8] sm:$0xff] %v864
    %993 = vst [vmem:[#allocation5 + $0x2f0] sm:$0xff] %v865
    %994 = vst [vmem:[#allocation5 + $0x2f8] sm:$0xff] %v866
    %995 = vst [vmem:[#allocation5 + $0x300] sm:$0xff] %v867
    %996 = vst [vmem:[#allocation5 + $0x308] sm:$0xff] %v868
    %997 = vst [vmem:[#allocation5 + $0x310] sm:$0xff] %v869
    %998 = vst [vmem:[#allocation5 + $0x318] sm:$0xff] %v870
    %999 = vst [vmem:[#allocation5 + $0x320] sm:$0xff] %v871
    %1000 = vst [vmem:[#allocation5 + $0x328] sm:$0xff] %v872
    %1001 = vst [vmem:[#allocation5 + $0x330] sm:$0xff] %v873
    %1002 = vst [vmem:[#allocation5 + $0x338] sm:$0xff] %v874
    %1003 = vst [vmem:[#allocation5 + $0x340] sm:$0xff] %v875
    %1004 = vst [vmem:[#allocation5 + $0x348] sm:$0xff] %v876
    %1005 = vst [vmem:[#allocation5 + $0x350] sm:$0xff] %v877
    %1006 = vst [vmem:[#allocation5 + $0x358] sm:$0xff] %v878
    %1007 = vst [vmem:[#allocation5 + $0x360] sm:$0xff] %v879
    %1008 = vst [vmem:[#allocation5 + $0x368] sm:$0xff] %v880
    %1009 = vst [vmem:[#allocation5 + $0x370] sm:$0xff] %v881
    %1010 = vst [vmem:[#allocation5 + $0x378] sm:$0xff] %v882
    %1011 = vst [vmem:[#allocation5 + $0x380] sm:$0xff] %v883
    %1012 = vst [vmem:[#allocation5 + $0x388] sm:$0xff] %v884
    %1013 = vst [vmem:[#allocation5 + $0x390] sm:$0xff] %v885
    %1014 = vst [vmem:[#allocation5 + $0x398] sm:$0xff] %v886
    %1015 = vst [vmem:[#allocation5 + $0x3a0] sm:$0xff] %v887
    %1016 = vst [vmem:[#allocation5 + $0x3a8] sm:$0xff] %v888
    %1017 = vst [vmem:[#allocation5 + $0x3b0] sm:$0xff] %v889
    %1018 = vst [vmem:[#allocation5 + $0x3b8] sm:$0xff] %v890
    %1019 = vst [vmem:[#allocation5 + $0x3c0] sm:$0xff] %v891
    %1020 = vst [vmem:[#allocation5 + $0x3c8] sm:$0xff] %v892
    %1021 = vst [vmem:[#allocation5 + $0x3d0] sm:$0xff] %v893
    %1022 = vst [vmem:[#allocation5 + $0x3d8] sm:$0xff] %v894
    %1023 = vst [vmem:[#allocation5 + $0x3e0] sm:$0xff] %v895
    %1024 = vst [vmem:[#allocation5 + $0x3e8] sm:$0xff] %v896
    %1025 = vst [vmem:[#allocation5 + $0x3f0] sm:$0xff] %v897
    %1026 = vst [vmem:[#allocation5 + $0x3f8] sm:$0xff] %v898
    // Predicated region
    $region26: #{tpu_custom_call.1} parent=1 // pred_check
      _
    $region27: #{tpu_custom_call.1} parent=1 // pred_check_branch
      %1028 = sbr.rel (0) target = $region29
    $region28: #{tpu_custom_call.1} parent=1 // pred_region
      %s1030 = ssub.s32 16384, 16384
      %1031 = vsyncadd [#allocation4], %s1030
      %s1032 = sshll.u32 [#allocation5], 4
      %s1033 = int_to_ptr.vmem [resolvable:$true] %s1032
      %1038 = dma.vmem_to_hbm [thread:$0]  %s1033, 16384, %s5, [#allocation4], 2048, 2048, 128
    $region29: #{tpu_custom_call.1} parent=1 // pred_fallthru
      _
    // Predicated region
    $region30: #{tpu_custom_call.1} parent=1 // pred_check
      _
    $region31: #{tpu_custom_call.1} parent=1 // pred_check_branch
      %1040 = sbr.rel (0) target = $region33
    $region32: #{tpu_custom_call.1} parent=1 // pred_region
      %1041 = dma.done [#allocation4], 16384
    $region33: #{tpu_custom_call.1} parent=1 // pred_fallthru
      _
    %1042 = vsyncpa [#allocation3], 1
    %1043 = vsyncpa [#allocation4], 1

</llo_original>
